<compile_context>
chip_gen: v7x
topology: tpu7x:2x2x1
jax: 0.10.0
libtpu: 0.0.40
codegen_flags: <defaults>
</compile_context>

<pallas_src>
import functools

import jax
import jax.numpy as jnp
from jax.experimental import pallas as pl
from jax.experimental.pallas import tpu as pltpu


_MAX_ANCHOR = 64      # precomputed sin/cos anchor rows (multiple of 8)
_MAX_TILE_ROWS = 512  # rows per output tile (already ~85% of HBM roofline)


def _cdiv(a: int, b: int) -> int:
    return -(-a // b)


def _round_up(n: int, m: int) -> int:
    return _cdiv(n, m) * m


def _pos_emb_kernel(s0_ref, c0_ref, th_ref, o_ref):
    """Produce one (tile_rows, d_model) tile of the sinusoidal PE table.

    Inputs (VMEM-resident across the whole grid via constant index_maps):
      s0_ref: (A, d) anchors -> sin(p0*w_j) for even j, cos(p0*w_j) for odd j
      c0_ref: (A, d) anchors -> cos(p0*w_j) for even j, -sin(p0*w_j) for odd j
      th_ref: (1, d) per-column inverse frequency  w_j = 1/10000^(2*floor(j/2)/d)

    Row p = i*tile_rows + A*g + p0 is built with the angle-addition identity
    out[p, j] = s0[p0, j]*cos(b) + c0[p0, j]*sin(b),  b = (i*tile_rows + A*g)*w_j,
    so the expensive sin/cos polynomial only runs on one (1, d) row per A-row
    group; each output element is one FMA pair on the VPU.
    """
    i = pl.program_id(0)
    tile_rows, d = o_ref.shape
    anchor = s0_ref.shape[0]
    groups = tile_rows // anchor

    s0 = s0_ref[...]                       # (A, d)
    c0 = c0_ref[...]                       # (A, d)
    th = th_ref[...][None]                 # (1, 1, d)

    # Per-group angle offsets b = (i*tile_rows + anchor*g) * theta.
    g = jax.lax.broadcasted_iota(jnp.int32, (groups, 1, d), 0).astype(jnp.float32)
    base = g * float(anchor) + (i * tile_rows).astype(jnp.float32)
    b = base * th                          # (groups, 1, d)
    sb = jnp.sin(b)
    cb = jnp.cos(b)

    # One (A, d) slab per group; static unroll (groups <= 8), static slices,
    # (1, d) -> (A, d) sublane broadcast is native and cheap.
    for gi in range(groups):
        o_ref[pl.ds(gi * anchor, anchor), :] = s0 * cb[gi] + c0 * sb[gi]


def _tiling(seq_len: int, d_model: int):
    """Pick (anchor_rows, tile_rows, grid_steps) for a (seq_len, d_model) table."""
    anchor = min(_MAX_ANCHOR, _round_up(seq_len, 8))
    # <= ~4 MiB per output buffer: double-buffered output plus resident anchor
    # inputs stay well under v5e's 16 MiB default scoped VMEM (32 MiB v6e/v7x).
    cap_rows = max(anchor, ((4 << 20) // max(d_model * 4, 1)) // anchor * anchor)
    tile = min(_MAX_TILE_ROWS, cap_rows, _round_up(seq_len, anchor))
    steps = _cdiv(seq_len, tile)
    if steps > 1 and steps % 2 == 1:
        # Even step count keeps v7x's two TensorCores balanced on the
        # "parallel" axis; near-free on single-core v5e/v6e (tiles stay large).
        tile = max(anchor, _round_up(_cdiv(seq_len, steps + 1), anchor))
        steps = _cdiv(seq_len, tile)
    return anchor, tile, steps


@functools.lru_cache(maxsize=8)
def _pos_emb_table(seq_len: int, d_model: int) -> jax.Array:
    """(1, seq_len, d_model) float32 sinusoidal table, built once per shape.

    NOTE: cached tables stay resident in device memory; maxsize is kept small
    so large (seq_len, d_model) combinations do not accumulate.
    """
    anchor, tile, steps = _tiling(seq_len, d_model)

    # Tiny per-column / per-anchor terms, built once in plain JAX and kept
    # VMEM-resident across the whole grid through constant index_maps.
    col = jnp.arange(d_model, dtype=jnp.int32)
    parity = col & 1                                            # 0 even, 1 odd
    expon = (col - parity).astype(jnp.float32) / float(d_model)
    inv_freq = 1.0 / jnp.power(10000.0, expon)                  # (d,) == 1/ratio

    p0 = jnp.arange(anchor, dtype=jnp.float32)[:, None]         # (A, 1)
    ang = p0 * inv_freq[None, :]                                # (A, d)
    even = (parity == 0)[None, :]
    # Anchors fold the even/odd sin-vs-cos split, so the kernel uses a single
    # formula: out = s0*cos(b) + c0*sin(b) = sin(p*w) (even) / cos(p*w) (odd).
    sin_anchor = jnp.where(even, jnp.sin(ang), jnp.cos(ang))
    cos_anchor = jnp.where(even, jnp.cos(ang), -jnp.sin(ang))
    theta = inv_freq[None, :]                                   # (1, d)

    return pl.pallas_call(
        _pos_emb_kernel,
        out_shape=jax.ShapeDtypeStruct((1, seq_len, d_model), jnp.float32),
        grid=(steps,),
        in_specs=[
            pl.BlockSpec((anchor, d_model), lambda i: (0, 0)),
            pl.BlockSpec((anchor, d_model), lambda i: (0, 0)),
            pl.BlockSpec((1, d_model), lambda i: (0, 0)),
        ],
        # Exact output shape: no pad+slice second HBM pass; a trailing partial
        # row block (and lane widths < 128) are masked by Pallas on writeback.
        out_specs=pl.BlockSpec((None, tile, d_model), lambda i: (0, i, 0)),
        compiler_params=pltpu.CompilerParams(
            dimension_semantics=("parallel",),
        ),
    )(sin_anchor, cos_anchor, theta)


def position_embedding_forward(x: jax.Array, d_model: int) -> jax.Array:
    """Equivalent of PositionEmbedding(d_model).forward(x).

    x: (batch, seq_len, ...) -- only x.shape[1] (seq_len) is used.
    Returns: (1, seq_len, d_model) float32 positional embedding.
    """
    return _pos_emb_table(int(x.shape[1]), int(d_model))


class PositionEmbedding:
    """Thin wrapper mirroring the torch module's interface."""

    def __init__(self, d_model: int, max_len: int = 5000) -> None:
        self.d_model = int(d_model)
        self.max_len = int(max_len)

    def __call__(self, x: jax.Array) -> jax.Array:
        seq_len = int(x.shape[1])
        if seq_len > self.max_len:
            raise ValueError(f"seq_len {seq_len} > max_len {self.max_len}")
        return _pos_emb_table(seq_len, self.d_model)


def _reference(seq_len: int, d_model: int) -> jax.Array:
    # Pure-JAX reference mirroring the torch __init__ construction (even d_model).
    position = jnp.arange(seq_len, dtype=jnp.float32)[:, None]
    expon = jnp.arange(0, d_model, 2, dtype=jnp.float32) / d_model
    ratio = jnp.power(10000.0, expon)
    pe = jnp.zeros((seq_len, d_model), dtype=jnp.float32)
    pe = pe.at[:, 0::2].set(jnp.sin(position / ratio))
    pe = pe.at[:, 1::2].set(jnp.cos(position / ratio))
    return pe[None, :, :]


if __name__ == "__main__":
    key = jax.random.PRNGKey(0)

    # Small mandated case: batch=2, seq=8, d_model=32 (x values are unused,
    # exactly like the torch forward -- only x.shape[1] matters).
    batch, seq, d_model = 2, 8, 32
    x = jax.random.normal(key, (batch, seq, d_model), dtype=jnp.float32)
    out = jax.block_until_ready(position_embedding_forward(x, d_model))
    ref = _reference(seq, d_model)
    assert out.shape == (1, seq, d_model), out.shape
    assert jnp.allclose(out, ref, atol=1e-5, rtol=1e-5), \
        f"small case max err {float(jnp.max(jnp.abs(out - ref)))}"

    # d_model not a multiple of 128 (masked lane stores), several anchor groups.
    seq2, d2 = 200, 64
    x2 = jnp.zeros((1, seq2, d2), dtype=jnp.float32)
    out2 = jax.block_until_ready(position_embedding_forward(x2, d2))
    ref2 = _reference(seq2, d2)
    assert out2.shape == (1, seq2, d2), out2.shape
    # Any two float32 implementations differ by O(|angle| * 2^-22) at the
    # largest positions (f32 angle rounding); tolerance reflects that bound.
    assert jnp.allclose(out2, ref2, atol=2e-4, rtol=1e-4), \
        f"mid case max err {float(jnp.max(jnp.abs(out2 - ref2)))}"

    # Multi-step grid with a partial last row block, lane-dense d_model.
    seq3, d3 = 1003, 128
    x3 = jnp.zeros((1, seq3, d3), dtype=jnp.float32)
    out3 = jax.block_until_ready(position_embedding_forward(x3, d3))
    ref3 = _reference(seq3, d3)
    assert out3.shape == (1, seq3, d3), out3.shape
    assert jnp.allclose(out3, ref3, atol=1e-3, rtol=1e-3), \
        f"large case max err {float(jnp.max(jnp.abs(out3 - ref3)))}"

    # Module-style wrapper (mirrors the torch interface).
    pe_mod = PositionEmbedding(d_model)
    out_mod = jax.block_until_ready(pe_mod(x))
    assert out_mod.shape == (1, seq, d_model), out_mod.shape

    print("KERNEL_OK")
</pallas_src>

<mosaic_0001>
module attributes {stable_mosaic.version = 11 : i64} {
  func.func @_pos_emb_kernel(%arg0: i32, %arg1: memref<8x32xf32, #tpu.memory_space<vmem>>, %arg2: memref<8x32xf32, #tpu.memory_space<vmem>>, %arg3: memref<1x32xf32, #tpu.memory_space<vmem>>, %arg4: memref<1x8x32xf32, #tpu.memory_space<vmem>>) attributes {dimension_semantics = [#tpu.dimension_semantics<parallel>], iteration_bounds = array<i64: 1>, scalar_prefetch = 0 : i64, scratch_operands = 0 : i64, tpu.core_type = #tpu.core_type<tc>, window_params = [{pipeline_mode = #tpu.pipeline_mode<synchronous>, transform_indices = @transform_0, window_bounds = array<i64: 8, 32>}, {pipeline_mode = #tpu.pipeline_mode<synchronous>, transform_indices = @transform_1, window_bounds = array<i64: 8, 32>}, {pipeline_mode = #tpu.pipeline_mode<synchronous>, transform_indices = @transform_2, window_bounds = array<i64: 1, 32>}, {transform_indices = @transform_3, window_bounds = array<i64: 1, 8, 32>}]} {
    %c0 = arith.constant 0 : index
    %c0_0 = arith.constant 0 : index
    %0 = vector.load %arg1[%c0, %c0_0] : memref<8x32xf32, #tpu.memory_space<vmem>>, vector<8x32xf32>
    %c0_1 = arith.constant 0 : index
    %c0_2 = arith.constant 0 : index
    %1 = vector.load %arg2[%c0_1, %c0_2] : memref<8x32xf32, #tpu.memory_space<vmem>>, vector<8x32xf32>
    %c0_3 = arith.constant 0 : index
    %c0_4 = arith.constant 0 : index
    %2 = vector.load %arg3[%c0_3, %c0_4] : memref<1x32xf32, #tpu.memory_space<vmem>>, vector<1x32xf32>
    %3 = vector.shape_cast %2 : vector<1x32xf32> to vector<1x1x32xf32>
    %4 = tpu.iota {dimensions = array<i32: 0>} : vector<1x1x32xi32>
    %5 = arith.sitofp %4 : vector<1x1x32xi32> to vector<1x1x32xf32>
    %cst = arith.constant 8.000000e+00 : f32
    %6 = vector.broadcast %cst : f32 to vector<1x1x32xf32>
    %7 = arith.mulf %5, %6 : vector<1x1x32xf32>
    %c8_i32 = arith.constant 8 : i32
    %8 = arith.muli %arg0, %c8_i32 : i32
    %9 = arith.sitofp %8 : i32 to f32
    %10 = vector.broadcast %9 : f32 to vector<1x1x32xf32>
    %11 = arith.addf %7, %10 : vector<1x1x32xf32>
    %12 = arith.mulf %11, %3 : vector<1x1x32xf32>
    %13 = math.sin %12 : vector<1x1x32xf32>
    %14 = math.cos %12 : vector<1x1x32xf32>
    %15 = vector.shape_cast %14 : vector<1x1x32xf32> to vector<1x32xf32>
    %16 = vector.broadcast %15 : vector<1x32xf32> to vector<8x32xf32>
    %17 = arith.mulf %0, %16 : vector<8x32xf32>
    %18 = vector.shape_cast %13 : vector<1x1x32xf32> to vector<1x32xf32>
    %19 = vector.broadcast %18 : vector<1x32xf32> to vector<8x32xf32>
    %20 = arith.mulf %1, %19 : vector<8x32xf32>
    %21 = arith.addf %17, %20 : vector<8x32xf32>
    %c0_5 = arith.constant 0 : index
    %c0_6 = arith.constant 0 : index
    %c0_7 = arith.constant 0 : index
    %22 = vector.load %arg4[%c0_5, %c0_6, %c0_7] : memref<1x8x32xf32, #tpu.memory_space<vmem>>, vector<1x8x32xf32>
    %23 = vector.shape_cast %22 : vector<1x8x32xf32> to vector<8x32xf32>
    %24 = vector.shape_cast %21 : vector<8x32xf32> to vector<1x8x32xf32>
    tpu.vector_store %arg4[%c0_5, %c0_6, %c0_7], %24 {strides = array<i32>} : memref<1x8x32xf32, #tpu.memory_space<vmem>>, vector<1x8x32xf32>,
    return
  }
  func.func @transform_0(%arg0: i32) -> (i32, i32) {
    %c0_i32 = arith.constant 0 : i32
    %c0_i32_0 = arith.constant 0 : i32
    %c0_i32_1 = arith.constant 0 : i32
    return %c0_i32, %c0_i32_0 : i32, i32
  }
  func.func @transform_1(%arg0: i32) -> (i32, i32) {
    %c0_i32 = arith.constant 0 : i32
    %c0_i32_0 = arith.constant 0 : i32
    %c0_i32_1 = arith.constant 0 : i32
    return %c0_i32, %c0_i32_0 : i32, i32
  }
  func.func @transform_2(%arg0: i32) -> (i32, i32) {
    %c0_i32 = arith.constant 0 : i32
    %c0_i32_0 = arith.constant 0 : i32
    %c0_i32_1 = arith.constant 0 : i32
    return %c0_i32, %c0_i32_0 : i32, i32
  }
  func.func @transform_3(%arg0: i32) -> (i32, i32, i32) {
    %c0_i32 = arith.constant 0 : i32
    %c0_i32_0 = arith.constant 0 : i32
    %c0_i32_1 = arith.constant 0 : i32
    return %c0_i32, %arg0, %c0_i32_0 : i32, i32, i32
  }
}

</mosaic_0001>

<llo_original>
// kernel: tpu_custom_call.1
$region0: #{tpu_custom_call.1}
  #allocation0 [shape = 'u32[]', space=smem, size = 0x4, offset = 0x4, fixed_abs, tag = 'smem constant byte address 0x4 - core index']
  #allocation1 [shape = 'u32[144,128]{1,0:T(1,128)}', space=vmem, size = 0x12000, scoped, tag = 'internal scratch']
  %s0 = inlined_call_operand.hbm [shape: f32[8,32], index: 0, kind: input, shape index: {}]
  %s1 = inlined_call_operand.hbm [shape: f32[8,32], index: 1, kind: input, shape index: {}]
  %s2 = inlined_call_operand.vmem [shape: f32[1,32], index: 2, kind: input, shape index: {}]
  %s3 = inlined_call_operand.hbm [shape: f32[1,8,32], index: 3, kind: output, shape index: {}]
  %s4 = sld [smem:[#allocation0]]
  $region30: #{tpu_custom_call.1} parent=0
    _
  %s6 = ssub.s32 1, %s4
  %s7 = scalar_select 0, %s6, %s4
  $region1: #{tpu_custom_call.1} parent=0
    #allocation2 [shape = 'u8[4096]{0}', space=vmem, size = 0x1000, scoped, tag = 'input window, operand 0, single buffered']
    #allocation3 [shape = 's32[1]{0}', space=sflag, size = 0x4, scoped, tag = 'scoped memory for tpu_custom_call.1']
    #allocation4 [shape = 's32[1]{0}', space=sflag, size = 0x4, scoped, tag = 'scoped memory for tpu_custom_call.1']
    #allocation5 [shape = 'u8[4096]{0}', space=vmem, size = 0x1000, scoped, tag = 'input window, operand 1, single buffered']
    #allocation6 [shape = 's32[1]{0}', space=sflag, size = 0x4, scoped, tag = 'scoped memory for tpu_custom_call.1']
    #allocation7 [shape = 'u8[4096]{0}', space=vmem, size = 0x1000, scoped, tag = 'output window, operand 0, single buffered']
    %8 = vsyncpa [#allocation3], 0
    %9 = vsyncpa [#allocation6], 0
    %10 = vsyncpa [#allocation4], 0
    // Predicated region
    $region2: #{tpu_custom_call.1} parent=1 // pred_check
      _
    $region3: #{tpu_custom_call.1} parent=1 // pred_check_branch
      %12 = sbr.rel (0) target = $region5
    $region4: #{tpu_custom_call.1} parent=1 // pred_region
      %s14 = ssub.s32 128, 128
      %15 = vsyncadd [#allocation3], %s14
      %s17 = sshll.u32 [#allocation2], 4
      %s18 = int_to_ptr.vmem [resolvable:$true] %s17
      %20 = dma.hbm_to_vmem [thread:$0]  %s0, 128, %s18, [#allocation3]
    $region5: #{tpu_custom_call.1} parent=1 // pred_fallthru
      _
    // Predicated region
    $region6: #{tpu_custom_call.1} parent=1 // pred_check
      _
    $region7: #{tpu_custom_call.1} parent=1 // pred_check_branch
      %22 = sbr.rel (0) target = $region9
    $region8: #{tpu_custom_call.1} parent=1 // pred_region
      %s24 = ssub.s32 128, 128
      %25 = vsyncadd [#allocation6], %s24
      %s27 = sshll.u32 [#allocation5], 4
      %s28 = int_to_ptr.vmem [resolvable:$true] %s27
      %30 = dma.hbm_to_vmem [thread:$0]  %s1, 128, %s28, [#allocation6]
    $region9: #{tpu_custom_call.1} parent=1 // pred_fallthru
      _
    // Predicated region
    $region10: #{tpu_custom_call.1} parent=1 // pred_check
      _
    $region11: #{tpu_custom_call.1} parent=1 // pred_check_branch
      %32 = sbr.rel (0) target = $region13
    $region12: #{tpu_custom_call.1} parent=1 // pred_region
      _
    $region13: #{tpu_custom_call.1} parent=1 // pred_fallthru
      _
    // Predicated region
    $region14: #{tpu_custom_call.1} parent=1 // pred_check
      _
    $region15: #{tpu_custom_call.1} parent=1 // pred_check_branch
      %34 = sbr.rel (0) target = $region17
    $region16: #{tpu_custom_call.1} parent=1 // pred_region
      %35 = dma.done [#allocation3], 128
    $region17: #{tpu_custom_call.1} parent=1 // pred_fallthru
      _
    // Predicated region
    $region18: #{tpu_custom_call.1} parent=1 // pred_check
      _
    $region19: #{tpu_custom_call.1} parent=1 // pred_check_branch
      %37 = sbr.rel (0) target = $region21
    $region20: #{tpu_custom_call.1} parent=1 // pred_region
      %38 = dma.done [#allocation6], 128
    $region21: #{tpu_custom_call.1} parent=1 // pred_fallthru
      _
    %v39 = vld [vmem:[#allocation2] sm:$0xff]
    %v40 = vld [vmem:[#allocation5] sm:$0xff]
    %v41 = vld [vmem:[%s2] sm:$0x1]
    %v42 = vcvt.s32.f32 0
    %v43 = vmul.f32 %v42, 8.0
    %s44 = smul.u32 0, 8
    %s45 = scvt.s32.f32 %s44
    %v46 = vstv %s45
    %v47 = vadd.f32 %v43, %v46
    %v48 = vmul.f32 %v47, %v41
    %v49 = vand.u32 2147483647, %v48
    %vm50 = vcmp.le.f32.partialorder %v49, 0.7853982
    %vm51 = vcmp.lt.s32.totalorder %v48, 0
    %v52 = vand.u32 %v48, 2139095040
    %v53 = vshrl.u32 %v52, 23
    %v54 = vsub.s32 %v53, 127
    %v55 = vand.u32 2147483647, %v48
    %v56 = vand.u32 %v55, 8388607
    %v57 = vor.u32 %v56, 8388608
    %v58 = vsub.s32 0, %v57
    %v59 = vadd.s32 %v54, 1
    %vm60 = vcmp.gt.s32.totalorder %v59, 0
    %v61 = vsel %vm60, %v59, 0
    %v62 = vshrl.u32 %v61, 5
    %v63 = vand.u32 %v61, 31
    %v64 = vsub.s32 32, %v63
    %v65 = vshrl.u32 683565275, %v64
    %v66 = vshll.u32 683565275, %v63
    %v67 = vshrl.u32 2475754826, %v64
    %v68 = vor.u32 %v66, %v67
    %v69 = vshll.u32 2475754826, %v63
    %v70 = vshrl.u32 2131351028, %v64
    %v71 = vor.u32 %v69, %v70
    %v72 = vshll.u32 2131351028, %v63
    %v73 = vshrl.u32 2102212464, %v64
    %v74 = vor.u32 %v72, %v73
    %v75 = vshll.u32 2102212464, %v63
    %v76 = vshrl.u32 920167782, %v64
    %v77 = vor.u32 %v75, %v76
    %v78 = vshll.u32 920167782, %v63
    %v79 = vshrl.u32 1326507024, %v64
    %v80 = vor.u32 %v78, %v79
    %vm81 = vcmp.lt.s32.totalorder %v62, 1
    %vm82 = vcmp.lt.s32.totalorder %v62, 2
    %vm83 = vcmp.lt.s32.totalorder %v62, 3
    %vm84 = vcmp.lt.s32.totalorder %v62, 4
    %v85 = vsel %vm81, %v65, %v68
    %v86 = vsel %vm84, %v74, 2102212464
    %v87 = vsel %vm83, %v71, %v86
    %v88 = vsel %vm82, %v85, %v87
    %v89 = vsel %vm81, %v68, %v71
    %v90 = vsel %vm84, %v77, 920167782
    %v91 = vsel %vm83, %v74, %v90
    %v92 = vsel %vm82, %v89, %v91
    %v93 = vsel %vm81, %v71, %v74
    %v94 = vsel %vm84, %v80, 1326507024
    %v95 = vsel %vm83, %v77, %v94
    %v96 = vsel %vm82, %v93, %v95
    %v97 = vshll.u32 %v57, 8
    %v98 = vmul.u32.u64.compose %v97, %v96
    %v99 = vextract.low.u32 %v98
    %v100 = vextract.high.u32 %v98
    %v101 = vmul.u32.u64.compose %v97, %v92
    %v102 = vextract.low.u32 %v101
    %v103 = vextract.high.u32 %v101
    %v104 = vmul.u32 %v97, %v88
    %v105 = vadd.s32 %v100, %v102
    %vm106 = vc.u32 %v100, %v102
    %v107 = vadd.s32 %v103, 1
    %v108 = vsel %vm106, %v107, %v103
    %v109 = vadd.s32 %v104, %v108
    %v110 = vadd.s32 %v109, 536870912
    %v111 = vshrl.u32 %v110, 30
    %v112 = vshll.u32 %v111, 30
    %v113 = vsub.s32 %v109, %v112
    %vm114 = vcmp.lt.s32.totalorder %v113, 0
    %v115 = vsub.s32 0, %v113
    %v116 = vsel %vm114, %v115, %v113
    %v117 = vclz %v116
    %v118 = vsub.s32 %v117, 2
    %vm119 = vcmp.gt.s32.totalorder 0, %v118
    %v120 = vsel %vm119, 0, %v118
    %v121 = vsub.s32 32, %v120
    %v122 = vshll.u32 %v113, %v120
    %v123 = vshrl.u32 %v105, %v121
    %v124 = vor.u32 %v122, %v123
    %v125 = vsub.s32 4294967266, %v120
    %v126 = vadd.s32 %v125, 127
    %v127 = vshll.u32 %v126, 23
    %v128 = vor.u32 4788187, %v127
    %v129 = vand.u32 2147483647, %v128
    %v131 = vcvt.s32.f32 %v124
    %v132 = vmul.f32 %v131, %v129
    %v133 = vxor.u32 %v132, 2147483648
    %v134 = vsel %vm51, %v133, %v132
    %v135 = vsub.s32 4, %v111
    %v136 = vsel %vm51, %v135, %v111
    %v137 = vsel %vm50, %v48, %v134
    %v138 = vsel %vm50, 0, %v136
    %v139 = vcosq.f32.pop %v137
    %v140 = vsinq.f32.pop %v137
    %vm141 = vweird.f32 %v48
    %v142 = vadd.s32 %v138, 3
    %v143 = vand.u32 %v142, 3
    %vm144 = vcmp.lt.s32.totalorder %v143, 2
    %vm145 = vcmp.eq.s32.totalorder %v143, 0
    %v146 = vxor.u32 %v140, 2147483648
    %v147 = vsel %vm145, %v139, %v146
    %vm148 = vcmp.eq.s32.totalorder %v143, 2
    %v149 = vxor.u32 %v139, 2147483648
    %v150 = vsel %vm148, %v149, %v140
    %v151 = vsel %vm144, %v147, %v150
    %v152 = vsel %vm141, nan, %v151
    %v153 = vand.u32 2147483647, %v48
    %vm154 = vcmp.le.f32.partialorder %v153, 0.7853982
    %vm155 = vcmp.lt.s32.totalorder %v48, 0
    %v156 = vand.u32 %v48, 2139095040
    %v157 = vshrl.u32 %v156, 23
    %v158 = vsub.s32 %v157, 127
    %v159 = vand.u32 2147483647, %v48
    %v160 = vand.u32 %v159, 8388607
    %v161 = vor.u32 %v160, 8388608
    %v162 = vsub.s32 0, %v161
    %v163 = vadd.s32 %v158, 1
    %vm164 = vcmp.gt.s32.totalorder %v163, 0
    %v165 = vsel %vm164, %v163, 0
    %v166 = vshrl.u32 %v165, 5
    %v167 = vand.u32 %v165, 31
    %v168 = vsub.s32 32, %v167
    %v169 = vshrl.u32 683565275, %v168
    %v170 = vshll.u32 683565275, %v167
    %v171 = vshrl.u32 2475754826, %v168
    %v172 = vor.u32 %v170, %v171
    %v173 = vshll.u32 2475754826, %v167
    %v174 = vshrl.u32 2131351028, %v168
    %v175 = vor.u32 %v173, %v174
    %v176 = vshll.u32 2131351028, %v167
    %v177 = vshrl.u32 2102212464, %v168
    %v178 = vor.u32 %v176, %v177
    %v179 = vshll.u32 2102212464, %v167
    %v180 = vshrl.u32 920167782, %v168
    %v181 = vor.u32 %v179, %v180
    %v182 = vshll.u32 920167782, %v167
    %v183 = vshrl.u32 1326507024, %v168
    %v184 = vor.u32 %v182, %v183
    %vm185 = vcmp.lt.s32.totalorder %v166, 1
    %vm186 = vcmp.lt.s32.totalorder %v166, 2
    %vm187 = vcmp.lt.s32.totalorder %v166, 3
    %vm188 = vcmp.lt.s32.totalorder %v166, 4
    %v189 = vsel %vm185, %v169, %v172
    %v190 = vsel %vm188, %v178, 2102212464
    %v191 = vsel %vm187, %v175, %v190
    %v192 = vsel %vm186, %v189, %v191
    %v193 = vsel %vm185, %v172, %v175
    %v194 = vsel %vm188, %v181, 920167782
    %v195 = vsel %vm187, %v178, %v194
    %v196 = vsel %vm186, %v193, %v195
    %v197 = vsel %vm185, %v175, %v178
    %v198 = vsel %vm188, %v184, 1326507024
    %v199 = vsel %vm187, %v181, %v198
    %v200 = vsel %vm186, %v197, %v199
    %v201 = vshll.u32 %v161, 8
    %v202 = vmul.u32.u64.compose %v201, %v200
    %v203 = vextract.low.u32 %v202
    %v204 = vextract.high.u32 %v202
    %v205 = vmul.u32.u64.compose %v201, %v196
    %v206 = vextract.low.u32 %v205
    %v207 = vextract.high.u32 %v205
    %v208 = vmul.u32 %v201, %v192
    %v209 = vadd.s32 %v204, %v206
    %vm210 = vc.u32 %v204, %v206
    %v211 = vadd.s32 %v207, 1
    %v212 = vsel %vm210, %v211, %v207
    %v213 = vadd.s32 %v208, %v212
    %v214 = vadd.s32 %v213, 536870912
    %v215 = vshrl.u32 %v214, 30
    %v216 = vshll.u32 %v215, 30
    %v217 = vsub.s32 %v213, %v216
    %vm218 = vcmp.lt.s32.totalorder %v217, 0
    %v219 = vsub.s32 0, %v217
    %v220 = vsel %vm218, %v219, %v217
    %v221 = vclz %v220
    %v222 = vsub.s32 %v221, 2
    %vm223 = vcmp.gt.s32.totalorder 0, %v222
    %v224 = vsel %vm223, 0, %v222
    %v225 = vsub.s32 32, %v224
    %v226 = vshll.u32 %v217, %v224
    %v227 = vshrl.u32 %v209, %v225
    %v228 = vor.u32 %v226, %v227
    %v229 = vsub.s32 4294967266, %v224
    %v230 = vadd.s32 %v229, 127
    %v231 = vshll.u32 %v230, 23
    %v232 = vor.u32 4788187, %v231
    %v233 = vand.u32 2147483647, %v232
    %v235 = vcvt.s32.f32 %v228
    %v236 = vmul.f32 %v235, %v233
    %v237 = vxor.u32 %v236, 2147483648
    %v238 = vsel %vm155, %v237, %v236
    %v239 = vsub.s32 4, %v215
    %v240 = vsel %vm155, %v239, %v215
    %v241 = vsel %vm154, %v48, %v238
    %v242 = vsel %vm154, 0, %v240
    %v243 = vcosq.f32.pop %v241
    %v244 = vsinq.f32.pop %v241
    %vm245 = vweird.f32 %v48
    %v246 = vand.u32 %v242, 3
    %vm247 = vcmp.lt.s32.totalorder %v246, 2
    %vm248 = vcmp.eq.s32.totalorder %v246, 0
    %v249 = vxor.u32 %v244, 2147483648
    %v250 = vsel %vm248, %v243, %v249
    %vm251 = vcmp.eq.s32.totalorder %v246, 2
    %v252 = vxor.u32 %v243, 2147483648
    %v253 = vsel %vm251, %v252, %v244
    %v254 = vsel %vm247, %v250, %v253
    %v255 = vsel %vm245, nan, %v254
    %v257 = vlaneseq
    %v258 = vshrl.u32 %v257, 7
    %v259 = vsub.s32 0, %v258
    %v260 = vrot.slane %v255, %v259
    %v262 = vmul.f32 %v39, %v260
    %v264 = vlaneseq
    %v265 = vshrl.u32 %v264, 7
    %v266 = vsub.s32 0, %v265
    %v267 = vrot.slane %v152, %v266
    %v269 = vmul.f32 %v40, %v267
    %v270 = vadd.f32 %v262, %v269
    %vm271 = vcmask 261120
    %272 = vst.msk [vmem:[#allocation7] sm:$0xff] %vm271, %v270
    // Predicated region
    $region22: #{tpu_custom_call.1} parent=1 // pred_check
      _
    $region23: #{tpu_custom_call.1} parent=1 // pred_check_branch
      %274 = sbr.rel (0) target = $region25
    $region24: #{tpu_custom_call.1} parent=1 // pred_region
      %s276 = ssub.s32 128, 128
      %277 = vsyncadd [#allocation4], %s276
      %s279 = sshll.u32 [#allocation7], 4
      %s280 = int_to_ptr.vmem [resolvable:$true] %s279
      %282 = dma.vmem_to_hbm [thread:$0]  %s280, 128, %s3, [#allocation4]
    $region25: #{tpu_custom_call.1} parent=1 // pred_fallthru
      _
    // Predicated region
    $region26: #{tpu_custom_call.1} parent=1 // pred_check
      _
    $region27: #{tpu_custom_call.1} parent=1 // pred_check_branch
      %284 = sbr.rel (0) target = $region29
    $region28: #{tpu_custom_call.1} parent=1 // pred_region
      %285 = dma.done [#allocation4], 128
    $region29: #{tpu_custom_call.1} parent=1 // pred_fallthru
      _
    %286 = vsyncpa [#allocation3], 1
    %287 = vsyncpa [#allocation6], 1
    %288 = vsyncpa [#allocation4], 1

</llo_original>
